<compile_context>
chip_gen: v5e
topology: v5e:2x2
jax: 0.10.0
libtpu: 0.0.40
codegen_flags: <defaults>
</compile_context>

<pallas_src>
import jax
import jax.numpy as jnp
from jax import lax
from jax.experimental import pallas as pl
from jax.experimental.pallas import tpu as pltpu


# ------------------------------ Pallas kernel ------------------------------ #

def _upsampling_bottleneck_kernel(x_ref, xp_ref, gmain_ref, w1k_ref, m2_ref,
                                  w3k_ref, comb_ref, bmain_ref, b1_ref,
                                  b2_ref, b3_ref, out_ref):
    """One grid step == one image; every intermediate stays in VMEM/vregs.

    Layouts (channels always the minor / lane dimension):
      x_ref, xp_ref : (1, H, W*Cin)      bf16 low-res row slabs
      out_ref       : (1, 2H, 2W*Cout)   bf16 hi-res row slabs (lane-dense)
    """
    f32 = jnp.float32
    bf16 = jnp.bfloat16

    x = x_ref[0]                                   # (H, W*Cin) bf16
    xp = xp_ref[0]

    # ---- main branch: 1x1 conv (BN scale folded) fused with the width
    # interpolation: g_main = kron(A_w^T, W_main*s_main).  Adding the BN bias
    # here (before the height interpolation) is only valid because
    # align_corners=True bilinear rows sum to 1, so a per-channel constant
    # passes through the interpolation unchanged.
    s_bf = (x.astype(f32) + xp.astype(f32)).astype(bf16)
    main_w = (jnp.dot(s_bf, gmain_ref[...], preferred_element_type=f32)
              + bmain_ref[...])                    # (H, 2W*Cout) f32

    # ---- ext branch.
    # ext_conv1: 1x1 conv + BN + ReLU  (kron(I_W, W1*s1) keeps the slab layout).
    e1 = jnp.maximum(
        jnp.dot(x, w1k_ref[...], preferred_element_type=f32) + b1_ref[...],
        0.0)                                       # (H, W*Cint) f32

    # ext_conv2: ConvTranspose2d(k=2, s=2, p=0) + BN + ReLU.  Both output-row
    # parities (kh=0 / kh=1) come out of ONE matmul against the column-merged
    # weight m2 = [m2_even | m2_odd].
    e2 = jnp.maximum(
        jnp.dot(e1.astype(bf16), m2_ref[...], preferred_element_type=f32)
        + b2_ref[...],
        0.0)                                       # (H, 2 * 2W*Cint) f32
    half = e2.shape[-1] // 2                       # = 2W*Cint, a 128-lane boundary
    e2_stk = jnp.concatenate([e2[:, :half], e2[:, half:]], axis=0)  # (2H, 2W*Cint)

    # ext_conv3: 1x1 conv + BN + ReLU; one MXU pass with M = 2H.
    e3_stk = jnp.maximum(
        jnp.dot(e2_stk.astype(bf16), w3k_ref[...], preferred_element_type=f32)
        + b3_ref[...],
        0.0)                                       # (2H, 2W*Cout) f32  [even; odd]

    # ---- height interpolation of main + even/odd row interleave of ext +
    # residual add as ONE stacked matmul with the precomputed f32 combiner
    # [A_h | S_even | S_odd] (2H, 3H).  Dropout2d(p=0) is the identity.
    stacked = jnp.concatenate([main_w, e3_stk], axis=0)   # (3H, 2W*Cout) f32
    out = jnp.maximum(
        jnp.dot(comb_ref[...], stacked, preferred_element_type=f32), 0.0)
    out_ref[0] = out.astype(out_ref.dtype)


# ---------------------- one-time constant preparation ---------------------- #

def _bilinear_matrix(n):
    """(2n, n) row matrix of F.interpolate(scale_factor=2, mode='bilinear',
    align_corners=True) weights along one axis (rows sum to 1)."""
    m = 2 * n
    i = jnp.arange(m, dtype=jnp.float32)
    src = i * (n - 1) / (m - 1)
    i0 = jnp.clip(jnp.floor(src).astype(jnp.int32), 0, n - 1)
    i1 = jnp.minimum(i0 + 1, n - 1)
    f = src - i0.astype(jnp.float32)
    a = jnp.zeros((m, n), jnp.float32)
    a = a.at[jnp.arange(m), i0].add(1.0 - f)
    a = a.at[jnp.arange(m), i1].add(f)
    return a


def prepare_constants(params, H, W):
    """Fold BN scales into the conv weights, build every structured constant
    ONCE (outside the jitted forward) and cast matmul weights to bf16."""
    f32, bf16 = jnp.float32, jnp.bfloat16
    w_main, w1, wt2, w3 = params["w_main"], params["w1"], params["wt2"], params["w3"]

    wm_s = (w_main * params["s_main"][None, :]).astype(f32)
    w1_s = (w1 * params["s1"][None, :]).astype(f32)
    w2_s = (wt2 * params["s2"][None, :, None, None]).astype(f32)  # (in, out, kh, kw)
    w3_s = (w3 * params["s3"][None, :]).astype(f32)

    a_h = _bilinear_matrix(H)                                # (2H, H) f32
    a_w = _bilinear_matrix(W)                                # (2W, W) f32

    # main: conv + width interpolation fused into one slab weight.
    g_main = jnp.kron(a_w.T, wm_s).astype(bf16)              # (W*Cin, 2W*Cout)
    # ext_conv1 (block-diagonal 1x1 conv on the slab).
    w1k = jnp.kron(jnp.eye(W, dtype=f32), w1_s).astype(bf16)  # (W*Cin, W*Cint)
    # ext_conv2: stride==kernel transposed conv as per-(kh,kw) 1x1 convs.
    idx = jnp.arange(W)
    p0 = jnp.zeros((W, 2 * W), f32).at[idx, 2 * idx].set(1.0)
    p1 = jnp.zeros((W, 2 * W), f32).at[idx, 2 * idx + 1].set(1.0)
    m2_even = jnp.kron(p0, w2_s[:, :, 0, 0]) + jnp.kron(p1, w2_s[:, :, 0, 1])
    m2_odd = jnp.kron(p0, w2_s[:, :, 1, 0]) + jnp.kron(p1, w2_s[:, :, 1, 1])
    m2 = jnp.concatenate([m2_even, m2_odd], axis=1).astype(bf16)  # (W*Cint, 4W*Cint)
    # ext_conv3.
    w3k = jnp.kron(jnp.eye(2 * W, dtype=f32), w3_s).astype(bf16)  # (2W*Cint, 2W*Cout)

    # Row combiner [A_h | S_even | S_odd]: height bilinear + even/odd interleave.
    hh = jnp.arange(H)
    s_even = jnp.zeros((2 * H, H), f32).at[2 * hh, hh].set(1.0)
    s_odd = jnp.zeros((2 * H, H), f32).at[2 * hh + 1, hh].set(1.0)
    comb = jnp.concatenate([a_h, s_even, s_odd], axis=1)     # (2H, 3H) f32

    # Per-channel biases tiled across the slab width (f32 VPU adds).
    b_main = jnp.tile(params["b_main"].astype(f32), (2 * W,))[None, :]
    b1 = jnp.tile(params["b1"].astype(f32), (W,))[None, :]
    b2 = jnp.tile(params["b2"].astype(f32), (4 * W,))[None, :]
    b3 = jnp.tile(params["b3"].astype(f32), (2 * W,))[None, :]

    return {"g_main": g_main, "w1k": w1k, "m2": m2, "w3k": w3k, "comb": comb,
            "b_main": b_main, "b1": b1, "b2": b2, "b3": b3}


# --------------------------------- wrapper --------------------------------- #

def upsampling_bottleneck(x_nchw, x_pre_nchw, consts):
    """Forward pass. x, x_pre: (N, Cin, H, W); returns (N, Cout, 2H, 2W) bf16."""
    N, Cin, H, W = x_nchw.shape
    Cout = consts["g_main"].shape[1] // (2 * W)

    # NCHW -> NHWC row slabs (N, H, W*Cin), bf16.
    # TODO(synk): accept NHWC inputs directly to drop this transpose pass.
    def to_slab(t):
        return jnp.transpose(t, (0, 2, 3, 1)).reshape(N, H, W * Cin).astype(jnp.bfloat16)
    x_slab, xp_slab = to_slab(x_nchw), to_slab(x_pre_nchw)

    img3 = lambda n: (n, 0, 0)
    full2 = lambda n: (0, 0)

    def const_spec(a):
        return pl.BlockSpec(a.shape, full2)

    out_slab = pl.pallas_call(
        _upsampling_bottleneck_kernel,
        grid=(N,),
        in_specs=[
            pl.BlockSpec((1, H, W * Cin), img3),      # x
            pl.BlockSpec((1, H, W * Cin), img3),      # x_pre
            const_spec(consts["g_main"]),             # fused main conv + A_w
            const_spec(consts["w1k"]),                # ext_conv1
            const_spec(consts["m2"]),                 # ext_conv2 (even|odd merged)
            const_spec(consts["w3k"]),                # ext_conv3
            const_spec(consts["comb"]),               # [A_h | S_even | S_odd]
            const_spec(consts["b_main"]),
            const_spec(consts["b1"]),
            const_spec(consts["b2"]),
            const_spec(consts["b3"]),
        ],
        out_specs=pl.BlockSpec((1, 2 * H, 2 * W * Cout), img3),
        out_shape=jax.ShapeDtypeStruct((N, 2 * H, 2 * W * Cout), jnp.bfloat16),
        compiler_params=pltpu.CompilerParams(
            # N >= 2 feeds both v7x TensorCores; for N == 1 on v5e/v6e fold the
            # batch/rows into a single step instead (per-step overhead).
            dimension_semantics=("parallel",)),
    )(x_slab, xp_slab, consts["g_main"], consts["w1k"], consts["m2"],
      consts["w3k"], consts["comb"], consts["b_main"], consts["b1"],
      consts["b2"], consts["b3"])

    # Lane-dense bf16 slab -> NHWC (free reshape) -> NCHW to match PyTorch API.
    # TODO(synk): drop this final transpose if the consumer accepts NHWC.
    return out_slab.reshape(N, 2 * H, 2 * W, Cout).transpose(0, 3, 1, 2)


# ---------------------------- pure-JAX reference ---------------------------- #

def _bilinear_x2_align_corners(t):
    """Gather + lerp bilinear x2 (align_corners=True) on NCHW, f32."""
    N, C, H, W = t.shape

    def idx(n):
        i = jnp.arange(2 * n, dtype=jnp.float32)
        src = i * (n - 1) / (2 * n - 1)
        i0 = jnp.clip(jnp.floor(src).astype(jnp.int32), 0, n - 1)
        i1 = jnp.minimum(i0 + 1, n - 1)
        return i0, i1, src - i0.astype(jnp.float32)

    h0, h1, fh = idx(H)
    w0, w1, fw = idx(W)
    rows = (t[:, :, h0, :] * (1.0 - fh)[None, None, :, None]
            + t[:, :, h1, :] * fh[None, None, :, None])
    return (rows[:, :, :, w0] * (1.0 - fw)[None, None, None, :]
            + rows[:, :, :, w1] * fw[None, None, None, :])


def reference(x_nchw, x_pre_nchw, params):
    """Independent path: f32 einsum convs, gather/lerp bilinear, dilated-conv
    ConvTranspose, on the same bf16 inputs."""
    hi = jax.lax.Precision.HIGHEST
    relu = lambda a: jnp.maximum(a, 0.0)
    ch = lambda v: v[None, :, None, None]
    x = x_nchw.astype(jnp.float32)
    xp = x_pre_nchw.astype(jnp.float32)

    # main branch
    main = jnp.einsum("nchw,co->nohw", x + xp, params["w_main"], precision=hi)
    main = main * ch(params["s_main"]) + ch(params["b_main"])
    main = _bilinear_x2_align_corners(main)

    # ext branch
    ext = jnp.einsum("nchw,co->nohw", x, params["w1"], precision=hi)
    ext = relu(ext * ch(params["s1"]) + ch(params["b1"]))

    # ConvTranspose2d(k=2, s=2, p=0) == lhs-dilated conv with flipped kernel.
    w_flip = params["wt2"][:, :, ::-1, ::-1]            # (in, out, kh, kw) flipped
    w_hwio = jnp.transpose(w_flip, (2, 3, 0, 1))        # (kh, kw, in, out)
    ext = jnp.transpose(ext, (0, 2, 3, 1))              # NHWC
    ext = lax.conv_general_dilated(
        ext, w_hwio, window_strides=(1, 1), padding=((1, 1), (1, 1)),
        lhs_dilation=(2, 2), dimension_numbers=("NHWC", "HWIO", "NHWC"),
        precision=hi)
    ext = jnp.transpose(ext, (0, 3, 1, 2))              # NCHW
    ext = relu(ext * ch(params["s2"]) + ch(params["b2"]))

    ext = jnp.einsum("nchw,co->nohw", ext, params["w3"], precision=hi)
    ext = relu(ext * ch(params["s3"]) + ch(params["b3"]))

    return relu(main + ext)                             # Dropout2d(p=0) identity


# ----------------------------------- main ----------------------------------- #

def make_params(key, Cin, Cout, Cint):
    ks = jax.random.split(key, 12)
    eps = 1e-5

    def bn(kg, kb, c):
        gamma = 1.0 + 0.1 * jax.random.normal(kg, (c,), jnp.float32)
        beta = 0.1 * jax.random.normal(kb, (c,), jnp.float32)
        # eval-mode BatchNorm with running_mean=0, running_var=1, folded.
        return gamma / jnp.sqrt(1.0 + eps), beta

    s_main, b_main = bn(ks[4], ks[5], Cout)
    s1, b1 = bn(ks[6], ks[7], Cint)
    s2, b2 = bn(ks[8], ks[9], Cint)
    s3, b3 = bn(ks[10], ks[11], Cout)
    return {
        "w_main": 0.2 * jax.random.normal(ks[0], (Cin, Cout), jnp.float32),
        "w1": 0.2 * jax.random.normal(ks[1], (Cin, Cint), jnp.float32),
        # ConvTranspose2d weight layout: (in_channels, out_channels, kh, kw)
        "wt2": 0.2 * jax.random.normal(ks[2], (Cint, Cint, 2, 2), jnp.float32),
        "w3": 0.2 * jax.random.normal(ks[3], (Cint, Cout), jnp.float32),
        "s_main": s_main, "b_main": b_main,
        "s1": s1, "b1": b1, "s2": s2, "b2": b2, "s3": s3, "b3": b3,
    }


if __name__ == "__main__":
    N, Cin, H, W = 2, 16, 16, 16
    Cout = 8
    Cint = Cin // 4          # internal_ratio = 4

    key = jax.random.PRNGKey(0)
    kx, kxp, kp = jax.random.split(key, 3)
    # bf16 activations for the memory-bound kernel; both the kernel and the
    # reference consume the same bf16 arrays (accumulation is f32).
    x = jax.random.normal(kx, (N, Cin, H, W), jnp.float32).astype(jnp.bfloat16)
    x_pre = jax.random.normal(kxp, (N, Cin, H, W), jnp.float32).astype(jnp.bfloat16)
    params = make_params(kp, Cin, Cout, Cint)

    # Structured constants are built ONCE, outside the jitted forward pass.
    consts = prepare_constants(params, H, W)

    fwd = jax.jit(upsampling_bottleneck)
    out = jax.block_until_ready(fwd(x, x_pre, consts))

    ref = reference(x, x_pre, params)
    assert out.shape == (N, Cout, 2 * H, 2 * W), out.shape
    out_f32 = out.astype(jnp.float32)
    max_err = float(jnp.max(jnp.abs(out_f32 - ref)))
    # Tolerance relaxed vs. the f32 kernel: bf16 weights / intermediates /
    # output introduce ~0.5-1% relative error (the review's noted trade-off).
    assert jnp.allclose(out_f32, ref, atol=3e-2, rtol=3e-2), max_err

    print("KERNEL_OK")
</pallas_src>

<mosaic_0001>
module attributes {stable_mosaic.version = 11 : i64} {
  func.func @_upsampling_bottleneck_kernel(%arg0: i32, %arg1: memref<1x16x256xbf16, #tpu.memory_space<vmem>>, %arg2: memref<1x16x256xbf16, #tpu.memory_space<vmem>>, %arg3: memref<256x256xbf16, #tpu.memory_space<vmem>>, %arg4: memref<256x64xbf16, #tpu.memory_space<vmem>>, %arg5: memref<64x256xbf16, #tpu.memory_space<vmem>>, %arg6: memref<128x256xbf16, #tpu.memory_space<vmem>>, %arg7: memref<32x48xf32, #tpu.memory_space<vmem>>, %arg8: memref<1x256xf32, #tpu.memory_space<vmem>>, %arg9: memref<1x64xf32, #tpu.memory_space<vmem>>, %arg10: memref<1x256xf32, #tpu.memory_space<vmem>>, %arg11: memref<1x256xf32, #tpu.memory_space<vmem>>, %arg12: memref<1x32x256xbf16, #tpu.memory_space<vmem>>) attributes {dimension_semantics = [#tpu.dimension_semantics<parallel>], iteration_bounds = array<i64: 2>, scalar_prefetch = 0 : i64, scratch_operands = 0 : i64, tpu.core_type = #tpu.core_type<tc>, window_params = [{transform_indices = @transform_0, window_bounds = array<i64: 1, 16, 256>}, {transform_indices = @transform_1, window_bounds = array<i64: 1, 16, 256>}, {pipeline_mode = #tpu.pipeline_mode<synchronous>, transform_indices = @transform_2, window_bounds = array<i64: 256, 256>}, {pipeline_mode = #tpu.pipeline_mode<synchronous>, transform_indices = @transform_3, window_bounds = array<i64: 256, 64>}, {pipeline_mode = #tpu.pipeline_mode<synchronous>, transform_indices = @transform_4, window_bounds = array<i64: 64, 256>}, {pipeline_mode = #tpu.pipeline_mode<synchronous>, transform_indices = @transform_5, window_bounds = array<i64: 128, 256>}, {pipeline_mode = #tpu.pipeline_mode<synchronous>, transform_indices = @transform_6, window_bounds = array<i64: 32, 48>}, {pipeline_mode = #tpu.pipeline_mode<synchronous>, transform_indices = @transform_7, window_bounds = array<i64: 1, 256>}, {pipeline_mode = #tpu.pipeline_mode<synchronous>, transform_indices = @transform_8, window_bounds = array<i64: 1, 64>}, {pipeline_mode = #tpu.pipeline_mode<synchronous>, transform_indices = @transform_9, window_bounds = array<i64: 1, 256>}, {pipeline_mode = #tpu.pipeline_mode<synchronous>, transform_indices = @transform_10, window_bounds = array<i64: 1, 256>}, {transform_indices = @transform_11, window_bounds = array<i64: 1, 32, 256>}]} {
    %c0 = arith.constant 0 : index
    %c0_0 = arith.constant 0 : index
    %c0_1 = arith.constant 0 : index
    %0 = vector.load %arg1[%c0, %c0_0, %c0_1] : memref<1x16x256xbf16, #tpu.memory_space<vmem>>, vector<1x16x256xbf16>
    %1 = vector.shape_cast %0 : vector<1x16x256xbf16> to vector<16x256xbf16>
    %c0_2 = arith.constant 0 : index
    %c0_3 = arith.constant 0 : index
    %c0_4 = arith.constant 0 : index
    %2 = vector.load %arg2[%c0_2, %c0_3, %c0_4] : memref<1x16x256xbf16, #tpu.memory_space<vmem>>, vector<1x16x256xbf16>
    %3 = vector.shape_cast %2 : vector<1x16x256xbf16> to vector<16x256xbf16>
    %4 = arith.extf %1 : vector<16x256xbf16> to vector<16x256xf32>
    %5 = arith.extf %3 : vector<16x256xbf16> to vector<16x256xf32>
    %6 = arith.addf %4, %5 : vector<16x256xf32>
    %7 = arith.truncf %6 : vector<16x256xf32> to vector<16x256xbf16>
    %c0_5 = arith.constant 0 : index
    %c0_6 = arith.constant 0 : index
    %8 = vector.load %arg3[%c0_5, %c0_6] : memref<256x256xbf16, #tpu.memory_space<vmem>>, vector<256x256xbf16>
    %cst = arith.constant dense<0.000000e+00> : vector<16x256xf32>
    %9 = tpu.matmul %7, %8, %cst {dimension_numbers = #tpu.dot_dimension_numbers<[1], [0], [0], [1], [0, 0, 1, 1], [], []>} : vector<16x256xbf16>, vector<256x256xbf16>, vector<16x256xf32> -> vector<16x256xf32>
    %c0_7 = arith.constant 0 : index
    %c0_8 = arith.constant 0 : index
    %10 = vector.load %arg8[%c0_7, %c0_8] : memref<1x256xf32, #tpu.memory_space<vmem>>, vector<1x256xf32>
    %11 = vector.broadcast %10 : vector<1x256xf32> to vector<16x256xf32>
    %12 = arith.addf %9, %11 : vector<16x256xf32>
    %c0_9 = arith.constant 0 : index
    %c0_10 = arith.constant 0 : index
    %13 = vector.load %arg4[%c0_9, %c0_10] : memref<256x64xbf16, #tpu.memory_space<vmem>>, vector<256x64xbf16>
    %cst_11 = arith.constant dense<0.000000e+00> : vector<16x64xf32>
    %14 = tpu.matmul %1, %13, %cst_11 {dimension_numbers = #tpu.dot_dimension_numbers<[1], [0], [0], [1], [0, 0, 1, 1], [], []>} : vector<16x256xbf16>, vector<256x64xbf16>, vector<16x64xf32> -> vector<16x64xf32>
    %c0_12 = arith.constant 0 : index
    %c0_13 = arith.constant 0 : index
    %15 = vector.load %arg9[%c0_12, %c0_13] : memref<1x64xf32, #tpu.memory_space<vmem>>, vector<1x64xf32>
    %16 = vector.broadcast %15 : vector<1x64xf32> to vector<16x64xf32>
    %17 = arith.addf %14, %16 : vector<16x64xf32>
    %cst_14 = arith.constant 0.000000e+00 : f32
    %18 = vector.broadcast %cst_14 : f32 to vector<16x64xf32>
    %19 = arith.maximumf %17, %18 : vector<16x64xf32>
    %20 = arith.truncf %19 : vector<16x64xf32> to vector<16x64xbf16>
    %c0_15 = arith.constant 0 : index
    %c0_16 = arith.constant 0 : index
    %21 = vector.load %arg5[%c0_15, %c0_16] : memref<64x256xbf16, #tpu.memory_space<vmem>>, vector<64x256xbf16>
    %cst_17 = arith.constant dense<0.000000e+00> : vector<16x256xf32>
    %22 = tpu.matmul %20, %21, %cst_17 {dimension_numbers = #tpu.dot_dimension_numbers<[1], [0], [0], [1], [0, 0, 1, 1], [], []>} : vector<16x64xbf16>, vector<64x256xbf16>, vector<16x256xf32> -> vector<16x256xf32>
    %c0_18 = arith.constant 0 : index
    %c0_19 = arith.constant 0 : index
    %23 = vector.load %arg10[%c0_18, %c0_19] : memref<1x256xf32, #tpu.memory_space<vmem>>, vector<1x256xf32>
    %24 = vector.broadcast %23 : vector<1x256xf32> to vector<16x256xf32>
    %25 = arith.addf %22, %24 : vector<16x256xf32>
    %cst_20 = arith.constant 0.000000e+00 : f32
    %26 = vector.broadcast %cst_20 : f32 to vector<16x256xf32>
    %27 = arith.maximumf %25, %26 : vector<16x256xf32>
    %28 = vector.extract_strided_slice %27 {offsets = [0, 0], sizes = [16, 128], strides = [1, 1]} : vector<16x256xf32> to vector<16x128xf32>
    %29 = vector.extract_strided_slice %27 {offsets = [0, 128], sizes = [16, 128], strides = [1, 1]} : vector<16x256xf32> to vector<16x128xf32>
    %30 = tpu.concatenate %28, %29 in 0 : vector<16x128xf32>, vector<16x128xf32> -> vector<32x128xf32>
    %31 = arith.truncf %30 : vector<32x128xf32> to vector<32x128xbf16>
    %c0_21 = arith.constant 0 : index
    %c0_22 = arith.constant 0 : index
    %32 = vector.load %arg6[%c0_21, %c0_22] : memref<128x256xbf16, #tpu.memory_space<vmem>>, vector<128x256xbf16>
    %cst_23 = arith.constant dense<0.000000e+00> : vector<32x256xf32>
    %33 = tpu.matmul %31, %32, %cst_23 {dimension_numbers = #tpu.dot_dimension_numbers<[1], [0], [0], [1], [0, 0, 1, 1], [], []>} : vector<32x128xbf16>, vector<128x256xbf16>, vector<32x256xf32> -> vector<32x256xf32>
    %c0_24 = arith.constant 0 : index
    %c0_25 = arith.constant 0 : index
    %34 = vector.load %arg11[%c0_24, %c0_25] : memref<1x256xf32, #tpu.memory_space<vmem>>, vector<1x256xf32>
    %35 = vector.broadcast %34 : vector<1x256xf32> to vector<32x256xf32>
    %36 = arith.addf %33, %35 : vector<32x256xf32>
    %cst_26 = arith.constant 0.000000e+00 : f32
    %37 = vector.broadcast %cst_26 : f32 to vector<32x256xf32>
    %38 = arith.maximumf %36, %37 : vector<32x256xf32>
    %39 = tpu.concatenate %12, %38 in 0 : vector<16x256xf32>, vector<32x256xf32> -> vector<48x256xf32>
    %c0_27 = arith.constant 0 : index
    %c0_28 = arith.constant 0 : index
    %40 = vector.load %arg7[%c0_27, %c0_28] : memref<32x48xf32, #tpu.memory_space<vmem>>, vector<32x48xf32>
    %cst_29 = arith.constant dense<0.000000e+00> : vector<32x256xf32>
    %41 = tpu.matmul %40, %39, %cst_29 {dimension_numbers = #tpu.dot_dimension_numbers<[1], [0], [0], [1], [0, 0, 1, 1], [], []>} : vector<32x48xf32>, vector<48x256xf32>, vector<32x256xf32> -> vector<32x256xf32>
    %cst_30 = arith.constant 0.000000e+00 : f32
    %42 = vector.broadcast %cst_30 : f32 to vector<32x256xf32>
    %43 = arith.maximumf %41, %42 : vector<32x256xf32>
    %44 = arith.truncf %43 : vector<32x256xf32> to vector<32x256xbf16>
    %c0_31 = arith.constant 0 : index
    %c0_32 = arith.constant 0 : index
    %c0_33 = arith.constant 0 : index
    %45 = vector.load %arg12[%c0_31, %c0_32, %c0_33] : memref<1x32x256xbf16, #tpu.memory_space<vmem>>, vector<1x32x256xbf16>
    %46 = vector.shape_cast %45 : vector<1x32x256xbf16> to vector<32x256xbf16>
    %47 = vector.shape_cast %44 : vector<32x256xbf16> to vector<1x32x256xbf16>
    tpu.vector_store %arg12[%c0_31, %c0_32, %c0_33], %47 {strides = array<i32>} : memref<1x32x256xbf16, #tpu.memory_space<vmem>>, vector<1x32x256xbf16>,
    return
  }
  func.func @transform_0(%arg0: i32) -> (i32, i32, i32) {
    %c0_i32 = arith.constant 0 : i32
    %c0_i32_0 = arith.constant 0 : i32
    %c0_i32_1 = arith.constant 0 : i32
    return %arg0, %c0_i32, %c0_i32_0 : i32, i32, i32
  }
  func.func @transform_1(%arg0: i32) -> (i32, i32, i32) {
    %c0_i32 = arith.constant 0 : i32
    %c0_i32_0 = arith.constant 0 : i32
    %c0_i32_1 = arith.constant 0 : i32
    return %arg0, %c0_i32, %c0_i32_0 : i32, i32, i32
  }
  func.func @transform_2(%arg0: i32) -> (i32, i32) {
    %c0_i32 = arith.constant 0 : i32
    %c0_i32_0 = arith.constant 0 : i32
    %c0_i32_1 = arith.constant 0 : i32
    return %c0_i32, %c0_i32_0 : i32, i32
  }
  func.func @transform_3(%arg0: i32) -> (i32, i32) {
    %c0_i32 = arith.constant 0 : i32
    %c0_i32_0 = arith.constant 0 : i32
    %c0_i32_1 = arith.constant 0 : i32
    return %c0_i32, %c0_i32_0 : i32, i32
  }
  func.func @transform_4(%arg0: i32) -> (i32, i32) {
    %c0_i32 = arith.constant 0 : i32
    %c0_i32_0 = arith.constant 0 : i32
    %c0_i32_1 = arith.constant 0 : i32
    return %c0_i32, %c0_i32_0 : i32, i32
  }
  func.func @transform_5(%arg0: i32) -> (i32, i32) {
    %c0_i32 = arith.constant 0 : i32
    %c0_i32_0 = arith.constant 0 : i32
    %c0_i32_1 = arith.constant 0 : i32
    return %c0_i32, %c0_i32_0 : i32, i32
  }
  func.func @transform_6(%arg0: i32) -> (i32, i32) {
    %c0_i32 = arith.constant 0 : i32
    %c0_i32_0 = arith.constant 0 : i32
    %c0_i32_1 = arith.constant 0 : i32
    return %c0_i32, %c0_i32_0 : i32, i32
  }
  func.func @transform_7(%arg0: i32) -> (i32, i32) {
    %c0_i32 = arith.constant 0 : i32
    %c0_i32_0 = arith.constant 0 : i32
    %c0_i32_1 = arith.constant 0 : i32
    return %c0_i32, %c0_i32_0 : i32, i32
  }
  func.func @transform_8(%arg0: i32) -> (i32, i32) {
    %c0_i32 = arith.constant 0 : i32
    %c0_i32_0 = arith.constant 0 : i32
    %c0_i32_1 = arith.constant 0 : i32
    return %c0_i32, %c0_i32_0 : i32, i32
  }
  func.func @transform_9(%arg0: i32) -> (i32, i32) {
    %c0_i32 = arith.constant 0 : i32
    %c0_i32_0 = arith.constant 0 : i32
    %c0_i32_1 = arith.constant 0 : i32
    return %c0_i32, %c0_i32_0 : i32, i32
  }
  func.func @transform_10(%arg0: i32) -> (i32, i32) {
    %c0_i32 = arith.constant 0 : i32
    %c0_i32_0 = arith.constant 0 : i32
    %c0_i32_1 = arith.constant 0 : i32
    return %c0_i32, %c0_i32_0 : i32, i32
  }
  func.func @transform_11(%arg0: i32) -> (i32, i32, i32) {
    %c0_i32 = arith.constant 0 : i32
    %c0_i32_0 = arith.constant 0 : i32
    %c0_i32_1 = arith.constant 0 : i32
    return %arg0, %c0_i32, %c0_i32_0 : i32, i32, i32
  }
}

</mosaic_0001>

<llo_original>
// kernel: upsampling_bottleneck.1
$region0: #{upsampling_bottleneck.1}
  #allocation0 [shape = 'u32[]', space=smem, size = 0x4, offset = 0x4, fixed_abs, tag = 'smem constant byte address 0x4 - core index']
  #allocation1 [shape = 'u32[72,128]{1,0:T(1,128)}', space=vmem, size = 0x9000, scoped, tag = 'internal scratch']
  %s0 = inlined_call_operand.vmem [shape: bf16[2,16,256], index: 0, kind: input, shape index: {}]
  %s1 = inlined_call_operand.vmem [shape: bf16[2,16,256], index: 1, kind: input, shape index: {}]
  %s2 = inlined_call_operand.vmem [shape: bf16[256,256], index: 2, kind: input, shape index: {}]
  %s3 = inlined_call_operand.vmem [shape: bf16[256,64], index: 3, kind: input, shape index: {}]
  %s4 = inlined_call_operand.vmem [shape: bf16[64,256], index: 4, kind: input, shape index: {}]
  %s5 = inlined_call_operand.vmem [shape: bf16[128,256], index: 5, kind: input, shape index: {}]
  %s6 = inlined_call_operand.vmem [shape: f32[32,48], index: 6, kind: input, shape index: {}]
  %s7 = inlined_call_operand.vmem [shape: f32[1,256], index: 7, kind: input, shape index: {}]
  %s8 = inlined_call_operand.vmem [shape: f32[1,64], index: 8, kind: input, shape index: {}]
  %s9 = inlined_call_operand.vmem [shape: f32[1,256], index: 9, kind: input, shape index: {}]
  %s10 = inlined_call_operand.vmem [shape: f32[1,256], index: 10, kind: input, shape index: {}]
  %s11 = inlined_call_operand.vmem [shape: bf16[2,32,256], index: 11, kind: output, shape index: {}]
  %s12 = sld [smem:[#allocation0]]
  $region77: #{upsampling_bottleneck.1} parent=0
    _
  %s14 = ssub.s32 1, %s12
  %s15 = scalar_select 0, %s14, %s12
  loop: start=0, step=1, limit=4
  $region2: #{upsampling_bottleneck.1} parent=0 // loop_pre_header
    _
  $region3: #{upsampling_bottleneck.1} parent=0 // loop_header
    %s17 = sphi 0, %s21
    %p18 = scmp.ge.s32.totalorder %s17, 4
    %s27 = sphi 0, %s29
    %s30 = sphi 0, %s27
    %s31 = sphi 0, %s30
    %s47 = sphi 0, %s31
    %s53 = sphi 0, %s55
    %s56 = sphi 0, %s53
    %s57 = sphi 0, %s56
    %s73 = sphi 0, %s57
    %s77 = sphi 0, %s77
    %s79 = sphi 0, %s77
    %s80 = sphi 0, %s79
    %s94 = sphi 0, %s80
    %s98 = sphi 0, %s98
    %s100 = sphi 0, %s98
    %s101 = sphi 0, %s100
    %s115 = sphi 0, %s101
    %s119 = sphi 0, %s119
    %s121 = sphi 0, %s119
    %s122 = sphi 0, %s121
    %s136 = sphi 0, %s122
    %s140 = sphi 0, %s140
    %s142 = sphi 0, %s140
    %s143 = sphi 0, %s142
    %s157 = sphi 0, %s143
    %s161 = sphi 0, %s161
    %s163 = sphi 0, %s161
    %s164 = sphi 0, %s163
    %s178 = sphi 0, %s164
    %s182 = sphi 0, %s182
    %s184 = sphi 0, %s182
    %s185 = sphi 0, %s184
    %s199 = sphi 0, %s185
    %s203 = sphi 0, %s203
    %s205 = sphi 0, %s203
    %s206 = sphi 0, %s205
    %s220 = sphi 0, %s206
    %s224 = sphi 0, %s224
    %s226 = sphi 0, %s224
    %s227 = sphi 0, %s226
    %s241 = sphi 0, %s227
    %s245 = sphi 0, %s245
    %s247 = sphi 0, %s245
    %s248 = sphi 0, %s247
    %s262 = sphi 0, %s248
    %s268 = sphi 0, %s270
    %s271 = sphi 0, %s268
    %s272 = sphi 0, %s271
    %s288 = sphi 0, %s272
  $region4: #{upsampling_bottleneck.1} parent=0 // loop_header_branch
    %20 = sbr.rel (%p18) target = $region8
  $region5: #{upsampling_bottleneck.1} parent=0 // loop_body
    %s22 = ssub.s32 %s17, 1
    %s23 = ssub.s32 %s17, 2
    %s24 = sadd.s32 %s17, 1
    %s25 = ssub.s32 %s17, %s24
    %p26 = scmp.eq.s32.totalorder %s25, 0
    %s28 = sadd.s32 %s27, 1
    %s29 = scalar_select %p26, %s27, %s28
    %p32 = pneg %p26
    %p33 = scmp.eq.s32.totalorder %s17, 1
    %p34 = por %p32, %p33
    %p35 = scmp.ne.s32.totalorder %s27, %s30
    %p36 = scmp.eq.s32.totalorder %s17, 0
    %p37 = por %p35, %p36
    %p38 = scmp.ne.s32.totalorder %s27, %s30
    %p39 = scmp.eq.s32.totalorder %s22, 1
    %p40 = por %p38, %p39
    %p41 = scmp.ne.s32.totalorder %s30, %s31
    %p42 = scmp.eq.s32.totalorder %s22, 0
    %p43 = por %p41, %p42
    %p44 = scmp.ne.s32.totalorder %s30, %s31
    %p45 = scmp.eq.s32.totalorder %s23, 1
    %p46 = por %p44, %p45
    %p48 = scmp.ne.s32.totalorder %s31, %s47
    %p49 = scmp.eq.s32.totalorder %s23, 0
    %p50 = por %p48, %p49
    %s51 = ssub.s32 %s17, %s24
    %p52 = scmp.eq.s32.totalorder %s51, 0
    %s54 = sadd.s32 %s53, 1
    %s55 = scalar_select %p52, %s53, %s54
    %p58 = pneg %p52
    %p59 = scmp.eq.s32.totalorder %s17, 1
    %p60 = por %p58, %p59
    %p61 = scmp.ne.s32.totalorder %s53, %s56
    %p62 = scmp.eq.s32.totalorder %s17, 0
    %p63 = por %p61, %p62
    %p64 = scmp.ne.s32.totalorder %s53, %s56
    %p65 = scmp.eq.s32.totalorder %s22, 1
    %p66 = por %p64, %p65
    %p67 = scmp.ne.s32.totalorder %s56, %s57
    %p68 = scmp.eq.s32.totalorder %s22, 0
    %p69 = por %p67, %p68
    %p70 = scmp.ne.s32.totalorder %s56, %s57
    %p71 = scmp.eq.s32.totalorder %s23, 1
    %p72 = por %p70, %p71
    %p74 = scmp.ne.s32.totalorder %s57, %s73
    %p75 = scmp.eq.s32.totalorder %s23, 0
    %p76 = por %p74, %p75
    %s78 = sadd.s32 %s77, 1
    %p81 = scmp.eq.s32.totalorder %s17, 1
    %p82 = scmp.ne.s32.totalorder %s77, %s79
    %p83 = scmp.eq.s32.totalorder %s17, 0
    %p84 = por %p82, %p83
    %p85 = scmp.ne.s32.totalorder %s77, %s79
    %p86 = scmp.eq.s32.totalorder %s22, 1
    %p87 = por %p85, %p86
    %p88 = scmp.ne.s32.totalorder %s79, %s80
    %p89 = scmp.eq.s32.totalorder %s22, 0
    %p90 = por %p88, %p89
    %p91 = scmp.ne.s32.totalorder %s79, %s80
    %p92 = scmp.eq.s32.totalorder %s23, 1
    %p93 = por %p91, %p92
    %p95 = scmp.ne.s32.totalorder %s80, %s94
    %p96 = scmp.eq.s32.totalorder %s23, 0
    %p97 = por %p95, %p96
    %s99 = sadd.s32 %s98, 1
    %p102 = scmp.eq.s32.totalorder %s17, 1
    %p103 = scmp.ne.s32.totalorder %s98, %s100
    %p104 = scmp.eq.s32.totalorder %s17, 0
    %p105 = por %p103, %p104
    %p106 = scmp.ne.s32.totalorder %s98, %s100
    %p107 = scmp.eq.s32.totalorder %s22, 1
    %p108 = por %p106, %p107
    %p109 = scmp.ne.s32.totalorder %s100, %s101
    %p110 = scmp.eq.s32.totalorder %s22, 0
    %p111 = por %p109, %p110
    %p112 = scmp.ne.s32.totalorder %s100, %s101
    %p113 = scmp.eq.s32.totalorder %s23, 1
    %p114 = por %p112, %p113
    %p116 = scmp.ne.s32.totalorder %s101, %s115
    %p117 = scmp.eq.s32.totalorder %s23, 0
    %p118 = por %p116, %p117
    %s120 = sadd.s32 %s119, 1
    %p123 = scmp.eq.s32.totalorder %s17, 1
    %p124 = scmp.ne.s32.totalorder %s119, %s121
    %p125 = scmp.eq.s32.totalorder %s17, 0
    %p126 = por %p124, %p125
    %p127 = scmp.ne.s32.totalorder %s119, %s121
    %p128 = scmp.eq.s32.totalorder %s22, 1
    %p129 = por %p127, %p128
    %p130 = scmp.ne.s32.totalorder %s121, %s122
    %p131 = scmp.eq.s32.totalorder %s22, 0
    %p132 = por %p130, %p131
    %p133 = scmp.ne.s32.totalorder %s121, %s122
    %p134 = scmp.eq.s32.totalorder %s23, 1
    %p135 = por %p133, %p134
    %p137 = scmp.ne.s32.totalorder %s122, %s136
    %p138 = scmp.eq.s32.totalorder %s23, 0
    %p139 = por %p137, %p138
    %s141 = sadd.s32 %s140, 1
    %p144 = scmp.eq.s32.totalorder %s17, 1
    %p145 = scmp.ne.s32.totalorder %s140, %s142
    %p146 = scmp.eq.s32.totalorder %s17, 0
    %p147 = por %p145, %p146
    %p148 = scmp.ne.s32.totalorder %s140, %s142
    %p149 = scmp.eq.s32.totalorder %s22, 1
    %p150 = por %p148, %p149
    %p151 = scmp.ne.s32.totalorder %s142, %s143
    %p152 = scmp.eq.s32.totalorder %s22, 0
    %p153 = por %p151, %p152
    %p154 = scmp.ne.s32.totalorder %s142, %s143
    %p155 = scmp.eq.s32.totalorder %s23, 1
    %p156 = por %p154, %p155
    %p158 = scmp.ne.s32.totalorder %s143, %s157
    %p159 = scmp.eq.s32.totalorder %s23, 0
    %p160 = por %p158, %p159
    %s162 = sadd.s32 %s161, 1
    %p165 = scmp.eq.s32.totalorder %s17, 1
    %p166 = scmp.ne.s32.totalorder %s161, %s163
    %p167 = scmp.eq.s32.totalorder %s17, 0
    %p168 = por %p166, %p167
    %p169 = scmp.ne.s32.totalorder %s161, %s163
    %p170 = scmp.eq.s32.totalorder %s22, 1
    %p171 = por %p169, %p170
    %p172 = scmp.ne.s32.totalorder %s163, %s164
    %p173 = scmp.eq.s32.totalorder %s22, 0
    %p174 = por %p172, %p173
    %p175 = scmp.ne.s32.totalorder %s163, %s164
    %p176 = scmp.eq.s32.totalorder %s23, 1
    %p177 = por %p175, %p176
    %p179 = scmp.ne.s32.totalorder %s164, %s178
    %p180 = scmp.eq.s32.totalorder %s23, 0
    %p181 = por %p179, %p180
    %s183 = sadd.s32 %s182, 1
    %p186 = scmp.eq.s32.totalorder %s17, 1
    %p187 = scmp.ne.s32.totalorder %s182, %s184
    %p188 = scmp.eq.s32.totalorder %s17, 0
    %p189 = por %p187, %p188
    %p190 = scmp.ne.s32.totalorder %s182, %s184
    %p191 = scmp.eq.s32.totalorder %s22, 1
    %p192 = por %p190, %p191
    %p193 = scmp.ne.s32.totalorder %s184, %s185
    %p194 = scmp.eq.s32.totalorder %s22, 0
    %p195 = por %p193, %p194
    %p196 = scmp.ne.s32.totalorder %s184, %s185
    %p197 = scmp.eq.s32.totalorder %s23, 1
    %p198 = por %p196, %p197
    %p200 = scmp.ne.s32.totalorder %s185, %s199
    %p201 = scmp.eq.s32.totalorder %s23, 0
    %p202 = por %p200, %p201
    %s204 = sadd.s32 %s203, 1
    %p207 = scmp.eq.s32.totalorder %s17, 1
    %p208 = scmp.ne.s32.totalorder %s203, %s205
    %p209 = scmp.eq.s32.totalorder %s17, 0
    %p210 = por %p208, %p209
    %p211 = scmp.ne.s32.totalorder %s203, %s205
    %p212 = scmp.eq.s32.totalorder %s22, 1
    %p213 = por %p211, %p212
    %p214 = scmp.ne.s32.totalorder %s205, %s206
    %p215 = scmp.eq.s32.totalorder %s22, 0
    %p216 = por %p214, %p215
    %p217 = scmp.ne.s32.totalorder %s205, %s206
    %p218 = scmp.eq.s32.totalorder %s23, 1
    %p219 = por %p217, %p218
    %p221 = scmp.ne.s32.totalorder %s206, %s220
    %p222 = scmp.eq.s32.totalorder %s23, 0
    %p223 = por %p221, %p222
    %s225 = sadd.s32 %s224, 1
    %p228 = scmp.eq.s32.totalorder %s17, 1
    %p229 = scmp.ne.s32.totalorder %s224, %s226
    %p230 = scmp.eq.s32.totalorder %s17, 0
    %p231 = por %p229, %p230
    %p232 = scmp.ne.s32.totalorder %s224, %s226
    %p233 = scmp.eq.s32.totalorder %s22, 1
    %p234 = por %p232, %p233
    %p235 = scmp.ne.s32.totalorder %s226, %s227
    %p236 = scmp.eq.s32.totalorder %s22, 0
    %p237 = por %p235, %p236
    %p238 = scmp.ne.s32.totalorder %s226, %s227
    %p239 = scmp.eq.s32.totalorder %s23, 1
    %p240 = por %p238, %p239
    %p242 = scmp.ne.s32.totalorder %s227, %s241
    %p243 = scmp.eq.s32.totalorder %s23, 0
    %p244 = por %p242, %p243
    %s246 = sadd.s32 %s245, 1
    %p249 = scmp.eq.s32.totalorder %s17, 1
    %p250 = scmp.ne.s32.totalorder %s245, %s247
    %p251 = scmp.eq.s32.totalorder %s17, 0
    %p252 = por %p250, %p251
    %p253 = scmp.ne.s32.totalorder %s245, %s247
    %p254 = scmp.eq.s32.totalorder %s22, 1
    %p255 = por %p253, %p254
    %p256 = scmp.ne.s32.totalorder %s247, %s248
    %p257 = scmp.eq.s32.totalorder %s22, 0
    %p258 = por %p256, %p257
    %p259 = scmp.ne.s32.totalorder %s247, %s248
    %p260 = scmp.eq.s32.totalorder %s23, 1
    %p261 = por %p259, %p260
    %p263 = scmp.ne.s32.totalorder %s248, %s262
    %p264 = scmp.eq.s32.totalorder %s23, 0
    %p265 = por %p263, %p264
    %s266 = ssub.s32 %s17, %s24
    %p267 = scmp.eq.s32.totalorder %s266, 0
    %s269 = sadd.s32 %s268, 1
    %s270 = scalar_select %p267, %s268, %s269
    %p273 = pneg %p267
    %p274 = scmp.eq.s32.totalorder %s17, 1
    %p275 = por %p273, %p274
    %p276 = scmp.ne.s32.totalorder %s268, %s271
    %p277 = scmp.eq.s32.totalorder %s17, 0
    %p278 = por %p276, %p277
    %p279 = scmp.ne.s32.totalorder %s268, %s271
    %p280 = scmp.eq.s32.totalorder %s22, 1
    %p281 = por %p279, %p280
    %p282 = scmp.ne.s32.totalorder %s271, %s272
    %p283 = scmp.eq.s32.totalorder %s22, 0
    %p284 = por %p282, %p283
    %p285 = scmp.ne.s32.totalorder %s271, %s272
    %p286 = scmp.eq.s32.totalorder %s23, 1
    %p287 = por %p285, %p286
    %p289 = scmp.ne.s32.totalorder %s272, %s288
    %p290 = scmp.eq.s32.totalorder %s23, 0
    %p291 = por %p289, %p290
    %p292 = scmp.le.s32.totalorder 1, %s17
    %p293 = scmp.lt.s32.totalorder %s17, 3
    %p294 = pnand %p292, %p293
    %p295 = pneg %p294
    // Predicated region
    $region9: #{upsampling_bottleneck.1} parent=5 // pred_check
      _
    $region10: #{upsampling_bottleneck.1} parent=5 // pred_check_branch
      %297 = sbr.rel (%p294) target = $region12
    $region11: #{upsampling_bottleneck.1} parent=5 // pred_region
      %s298 = ssub.s32 %s17, 1
      // Predicated region
      $region13: #{upsampling_bottleneck.1} parent=11 // pred_check
        %p299 = pneg %p90
      $region14: #{upsampling_bottleneck.1} parent=11 // pred_check_branch
        %301 = sbr.rel (%p299) target = $region16
      $region15: #{upsampling_bottleneck.1} parent=11 // pred_region
        _
      $region16: #{upsampling_bottleneck.1} parent=11 // pred_fallthru
        _
      // Predicated region
      $region17: #{upsampling_bottleneck.1} parent=11 // pred_check
        %p302 = pneg %p111
      $region18: #{upsampling_bottleneck.1} parent=11 // pred_check_branch
        %304 = sbr.rel (%p302) target = $region20
      $region19: #{upsampling_bottleneck.1} parent=11 // pred_region
        _
      $region20: #{upsampling_bottleneck.1} parent=11 // pred_fallthru
        _
      // Predicated region
      $region21: #{upsampling_bottleneck.1} parent=11 // pred_check
        %p305 = pneg %p132
      $region22: #{upsampling_bottleneck.1} parent=11 // pred_check_branch
        %307 = sbr.rel (%p305) target = $region24
      $region23: #{upsampling_bottleneck.1} parent=11 // pred_region
        _
      $region24: #{upsampling_bottleneck.1} parent=11 // pred_fallthru
        _
      // Predicated region
      $region25: #{upsampling_bottleneck.1} parent=11 // pred_check
        %p308 = pneg %p153
      $region26: #{upsampling_bottleneck.1} parent=11 // pred_check_branch
        %310 = sbr.rel (%p308) target = $region28
      $region27: #{upsampling_bottleneck.1} parent=11 // pred_region
        _
      $region28: #{upsampling_bottleneck.1} parent=11 // pred_fallthru
        _
      // Predicated region
      $region29: #{upsampling_bottleneck.1} parent=11 // pred_check
        %p311 = pneg %p174
      $region30: #{upsampling_bottleneck.1} parent=11 // pred_check_branch
        %313 = sbr.rel (%p311) target = $region32
      $region31: #{upsampling_bottleneck.1} parent=11 // pred_region
        _
      $region32: #{upsampling_bottleneck.1} parent=11 // pred_fallthru
        _
      // Predicated region
      $region33: #{upsampling_bottleneck.1} parent=11 // pred_check
        %p314 = pneg %p195
      $region34: #{upsampling_bottleneck.1} parent=11 // pred_check_branch
        %316 = sbr.rel (%p314) target = $region36
      $region35: #{upsampling_bottleneck.1} parent=11 // pred_region
        _
      $region36: #{upsampling_bottleneck.1} parent=11 // pred_fallthru
        _
      // Predicated region
      $region37: #{upsampling_bottleneck.1} parent=11 // pred_check
        %p317 = pneg %p216
      $region38: #{upsampling_bottleneck.1} parent=11 // pred_check_branch
        %319 = sbr.rel (%p317) target = $region40
      $region39: #{upsampling_bottleneck.1} parent=11 // pred_region
        _
      $region40: #{upsampling_bottleneck.1} parent=11 // pred_fallthru
        _
      // Predicated region
      $region41: #{upsampling_bottleneck.1} parent=11 // pred_check
        %p320 = pneg %p237
      $region42: #{upsampling_bottleneck.1} parent=11 // pred_check_branch
        %322 = sbr.rel (%p320) target = $region44
      $region43: #{upsampling_bottleneck.1} parent=11 // pred_region
        _
      $region44: #{upsampling_bottleneck.1} parent=11 // pred_fallthru
        _
      // Predicated region
      $region45: #{upsampling_bottleneck.1} parent=11 // pred_check
        %p323 = pneg %p258
      $region46: #{upsampling_bottleneck.1} parent=11 // pred_check_branch
        %325 = sbr.rel (%p323) target = $region48
      $region47: #{upsampling_bottleneck.1} parent=11 // pred_region
        _
      $region48: #{upsampling_bottleneck.1} parent=11 // pred_fallthru
        _
    $region12: #{upsampling_bottleneck.1} parent=5 // pred_fallthru
      _
    %p326 = scmp.lt.s32.totalorder %s17, 2
    // Predicated region
    $region49: #{upsampling_bottleneck.1} parent=5 // pred_check
      %p327 = pneg %p326
    $region50: #{upsampling_bottleneck.1} parent=5 // pred_check_branch
      %329 = sbr.rel (%p327) target = $region52
    $region51: #{upsampling_bottleneck.1} parent=5 // pred_region
      // Predicated region
      $region53: #{upsampling_bottleneck.1} parent=51 // pred_check
        %p330 = pneg %p37
      $region54: #{upsampling_bottleneck.1} parent=51 // pred_check_branch
        %332 = sbr.rel (%p330) target = $region56
      $region55: #{upsampling_bottleneck.1} parent=51 // pred_region
        %p333 = scmp.lt.s32.totalorder %s17, 1
        %s334 = scalar_select %p333, %s17, 1
        %s335 = smul.addr %s334, 4
        %s336 = smul.addr %s335, 4
        %s337 = scalar_lea.vmem %s0, %s336
      $region56: #{upsampling_bottleneck.1} parent=51 // pred_fallthru
        _
      // Predicated region
      $region57: #{upsampling_bottleneck.1} parent=51 // pred_check
        %p338 = pneg %p63
      $region58: #{upsampling_bottleneck.1} parent=51 // pred_check_branch
        %340 = sbr.rel (%p338) target = $region60
      $region59: #{upsampling_bottleneck.1} parent=51 // pred_region
        %p341 = scmp.lt.s32.totalorder %s17, 1
        %s342 = scalar_select %p341, %s17, 1
        %s343 = smul.addr %s342, 4
        %s344 = smul.addr %s343, 4
        %s345 = scalar_lea.vmem %s1, %s344
      $region60: #{upsampling_bottleneck.1} parent=51 // pred_fallthru
        _
    $region52: #{upsampling_bottleneck.1} parent=5 // pred_fallthru
      _
    %p346 = scmp.le.s32.totalorder 1, %s17
    %p347 = scmp.lt.s32.totalorder %s17, 3
    %p348 = pnand %p346, %p347
    %p349 = pneg %p348
    // Predicated region
    $region61: #{upsampling_bottleneck.1} parent=5 // pred_check
      _
    $region62: #{upsampling_bottleneck.1} parent=5 // pred_check_branch
      %351 = sbr.rel (%p348) target = $region64
    $region63: #{upsampling_bottleneck.1} parent=5 // pred_region
      %s352 = ssub.s32 %s17, 1
      %p353 = scmp.lt.s32.totalorder %s22, 1
      %s354 = scalar_select %p353, %s22, 1
      %s355 = smul.addr %s354, 4
      %s356 = smul.addr %s355, 4
      %s357 = scalar_lea.vmem %s0, %s356
      %p358 = pneg %p43
      %p359 = pneg %p40
      %p360 = scmp.lt.s32.totalorder %s22, 1
      %s361 = scalar_select %p360, %s22, 1
      %s362 = smul.addr %s361, 4
      %s363 = smul.addr %s362, 4
      %s364 = scalar_lea.vmem %s1, %s363
      %p365 = pneg %p69
      %p366 = pneg %p66
      %p367 = pneg %p90
      %p368 = pneg %p87
      %p369 = pneg %p111
      %p370 = pneg %p108
      %p371 = pneg %p132
      %p372 = pneg %p129
      %p373 = pneg %p153
      %p374 = pneg %p150
      %p375 = pneg %p174
      %p376 = pneg %p171
      %p377 = pneg %p195
      %p378 = pneg %p192
      %p379 = pneg %p216
      %p380 = pneg %p213
      %p381 = pneg %p237
      %p382 = pneg %p234
      %p383 = pneg %p258
      %p384 = pneg %p255
      %p385 = pneg %p284
      %p386 = pneg %p281
      %p387 = scmp.lt.s32.totalorder %s22, 1
      %s388 = scalar_select %p387, %s22, 1
      %s389 = smul.addr %s388, 8
      %s390 = smul.addr %s389, 4
      %s391 = scalar_lea.vmem %s11, %s390
      %p392 = scmp.lt.s32.totalorder %s22, 1
      %s393 = scalar_select %p392, %s22, 1
      %s394 = smul.addr %s393, 4
      %s395 = smul.addr %s394, 4
      %s396 = scalar_lea.vmem %s0, %s395
      %p397 = scmp.lt.s32.totalorder %s22, 1
      %s398 = scalar_select %p397, %s22, 1
      %s399 = smul.addr %s398, 4
      %s400 = smul.addr %s399, 4
      %s401 = scalar_lea.vmem %s1, %s400
      %p402 = scmp.lt.s32.totalorder %s22, 1
      %s403 = scalar_select %p402, %s22, 1
      %s404 = smul.addr %s403, 8
      %s405 = smul.addr %s404, 4
      %s406 = scalar_lea.vmem %s11, %s405
      %v408 = vld [vmem:[%s396] sm:$0xff]
      %v409 = vld [vmem:[%s396 + $0x8] sm:$0xff]
      %v410 = vld [vmem:[%s401] sm:$0xff]
      %v411 = vld [vmem:[%s401 + $0x8] sm:$0xff]
      %v412 = vunpack.c.l.bf16 %v408
      %v413 = vunpack.c.h.bf16 %v408
      %v414 = vunpack.c.l.bf16 %v409
      %v415 = vunpack.c.h.bf16 %v409
      %v416 = vunpack.c.l.bf16 %v410
      %v417 = vunpack.c.h.bf16 %v410
      %v418 = vunpack.c.l.bf16 %v411
      %v419 = vunpack.c.h.bf16 %v411
      %v420 = vadd.f32 %v412, %v416
      %v421 = vadd.f32 %v413, %v417
      %v422 = vadd.f32 %v414, %v418
      %v423 = vadd.f32 %v415, %v419
      %v424 = vpack.c.bf16 %v422, %v420
      %v425 = vpack.c.bf16 %v423, %v421
      %v426 = vld [vmem:[%s2] sm:$0xff]
      %v427 = vld [vmem:[%s2 + $0x8] sm:$0xff]
      %v428 = vld [vmem:[%s2 + $0x10] sm:$0xff]
      %v429 = vld [vmem:[%s2 + $0x18] sm:$0xff]
      %v430 = vld [vmem:[%s2 + $0x20] sm:$0xff]
      %v431 = vld [vmem:[%s2 + $0x28] sm:$0xff]
      %v432 = vld [vmem:[%s2 + $0x30] sm:$0xff]
      %v433 = vld [vmem:[%s2 + $0x38] sm:$0xff]
      %v434 = vld [vmem:[%s2 + $0x40] sm:$0xff]
      %v435 = vld [vmem:[%s2 + $0x48] sm:$0xff]
      %v436 = vld [vmem:[%s2 + $0x50] sm:$0xff]
      %v437 = vld [vmem:[%s2 + $0x58] sm:$0xff]
      %v438 = vld [vmem:[%s2 + $0x60] sm:$0xff]
      %v439 = vld [vmem:[%s2 + $0x68] sm:$0xff]
      %v440 = vld [vmem:[%s2 + $0x70] sm:$0xff]
      %v441 = vld [vmem:[%s2 + $0x78] sm:$0xff]
      %v442 = vld [vmem:[%s2 + $0x80] sm:$0xff]
      %v443 = vld [vmem:[%s2 + $0x88] sm:$0xff]
      %v444 = vld [vmem:[%s2 + $0x90] sm:$0xff]
      %v445 = vld [vmem:[%s2 + $0x98] sm:$0xff]
      %v446 = vld [vmem:[%s2 + $0xa0] sm:$0xff]
      %v447 = vld [vmem:[%s2 + $0xa8] sm:$0xff]
      %v448 = vld [vmem:[%s2 + $0xb0] sm:$0xff]
      %v449 = vld [vmem:[%s2 + $0xb8] sm:$0xff]
      %v450 = vld [vmem:[%s2 + $0xc0] sm:$0xff]
      %v451 = vld [vmem:[%s2 + $0xc8] sm:$0xff]
      %v452 = vld [vmem:[%s2 + $0xd0] sm:$0xff]
      %v453 = vld [vmem:[%s2 + $0xd8] sm:$0xff]
      %v454 = vld [vmem:[%s2 + $0xe0] sm:$0xff]
      %v455 = vld [vmem:[%s2 + $0xe8] sm:$0xff]
      %v456 = vld [vmem:[%s2 + $0xf0] sm:$0xff]
      %v457 = vld [vmem:[%s2 + $0xf8] sm:$0xff]
      %v458 = vld [vmem:[%s7] sm:$0x3]
      %v460 = vperm.slane %v458, 0
      %v461 = vperm.slane %v458, 1
      %v496 = vunpack.c.l.b16 %v426
      %v497 = vunpack.c.h.b16 %v426
      %v498 = vunpack.c.l.b16 %v427
      %v499 = vunpack.c.h.b16 %v427
      %v500 = vunpack.c.l.b16 %v428
      %v501 = vunpack.c.h.b16 %v428
      %v502 = vunpack.c.l.b16 %v429
      %v503 = vunpack.c.h.b16 %v429
      %v504 = vunpack.c.l.b16 %v430
      %v505 = vunpack.c.h.b16 %v430
      %v506 = vunpack.c.l.b16 %v431
      %v507 = vunpack.c.h.b16 %v431
      %v508 = vunpack.c.l.b16 %v432
      %v509 = vunpack.c.h.b16 %v432
      %v510 = vunpack.c.l.b16 %v433
      %v511 = vunpack.c.h.b16 %v433
      %v512 = vunpack.c.l.b16 %v434
      %v513 = vunpack.c.h.b16 %v434
      %v514 = vunpack.c.l.b16 %v435
      %v515 = vunpack.c.h.b16 %v435
      %v516 = vunpack.c.l.b16 %v436
      %v517 = vunpack.c.h.b16 %v436
      %v518 = vunpack.c.l.b16 %v437
      %v519 = vunpack.c.h.b16 %v437
      %v520 = vunpack.c.l.b16 %v438
      %v521 = vunpack.c.h.b16 %v438
      %v522 = vunpack.c.l.b16 %v439
      %v523 = vunpack.c.h.b16 %v439
      %v524 = vunpack.c.l.b16 %v440
      %v525 = vunpack.c.h.b16 %v440
      %v526 = vunpack.c.l.b16 %v441
      %v527 = vunpack.c.h.b16 %v441
      %v528 = vunpack.c.l.b16 %v442
      %v529 = vunpack.c.h.b16 %v442
      %v530 = vunpack.c.l.b16 %v443
      %v531 = vunpack.c.h.b16 %v443
      %v532 = vunpack.c.l.b16 %v444
      %v533 = vunpack.c.h.b16 %v444
      %v534 = vunpack.c.l.b16 %v445
      %v535 = vunpack.c.h.b16 %v445
      %v536 = vunpack.c.l.b16 %v446
      %v537 = vunpack.c.h.b16 %v446
      %v538 = vunpack.c.l.b16 %v447
      %v539 = vunpack.c.h.b16 %v447
      %v540 = vunpack.c.l.b16 %v448
      %v541 = vunpack.c.h.b16 %v448
      %v542 = vunpack.c.l.b16 %v449
      %v543 = vunpack.c.h.b16 %v449
      %v544 = vunpack.c.l.b16 %v450
      %v545 = vunpack.c.h.b16 %v450
      %v546 = vunpack.c.l.b16 %v451
      %v547 = vunpack.c.h.b16 %v451
      %v548 = vunpack.c.l.b16 %v452
      %v549 = vunpack.c.h.b16 %v452
      %v550 = vunpack.c.l.b16 %v453
      %v551 = vunpack.c.h.b16 %v453
      %v552 = vunpack.c.l.b16 %v454
      %v553 = vunpack.c.h.b16 %v454
      %v554 = vunpack.c.l.b16 %v455
      %v555 = vunpack.c.h.b16 %v455
      %v556 = vunpack.c.l.b16 %v456
      %v557 = vunpack.c.h.b16 %v456
      %v558 = vunpack.c.l.b16 %v457
      %v559 = vunpack.c.h.b16 %v457
      %v560 = vpack.c.b16 %v498, %v496
      %v561 = vpack.c.b16 %v499, %v497
      %v562 = vpack.c.b16 %v502, %v500
      %v563 = vpack.c.b16 %v503, %v501
      %v564 = vpack.c.b16 %v506, %v504
      %v565 = vpack.c.b16 %v507, %v505
      %v566 = vpack.c.b16 %v510, %v508
      %v567 = vpack.c.b16 %v511, %v509
      %v568 = vpack.c.b16 %v514, %v512
      %v569 = vpack.c.b16 %v515, %v513
      %v570 = vpack.c.b16 %v518, %v516
      %v571 = vpack.c.b16 %v519, %v517
      %v572 = vpack.c.b16 %v522, %v520
      %v573 = vpack.c.b16 %v523, %v521
      %v574 = vpack.c.b16 %v526, %v524
      %v575 = vpack.c.b16 %v527, %v525
      %v576 = vpack.c.b16 %v530, %v528
      %v577 = vpack.c.b16 %v531, %v529
      %v578 = vpack.c.b16 %v534, %v532
      %v579 = vpack.c.b16 %v535, %v533
      %v580 = vpack.c.b16 %v538, %v536
      %v581 = vpack.c.b16 %v539, %v537
      %v582 = vpack.c.b16 %v542, %v540
      %v583 = vpack.c.b16 %v543, %v541
      %v584 = vpack.c.b16 %v546, %v544
      %v585 = vpack.c.b16 %v547, %v545
      %v586 = vpack.c.b16 %v550, %v548
      %v587 = vpack.c.b16 %v551, %v549
      %v588 = vpack.c.b16 %v554, %v552
      %v589 = vpack.c.b16 %v555, %v553
      %v590 = vpack.c.b16 %v558, %v556
      %v591 = vpack.c.b16 %v559, %v557
      %624 = vmatpush.bf16.msra.mxu0 %v574
      %625 = vmatpush.bf16.msra.mxu0 %v572
      %626 = vmatpush.bf16.msra.mxu0 %v570
      %627 = vmatpush.bf16.msra.mxu0 %v568
      %628 = vmatpush.bf16.msra.mxu0 %v566
      %629 = vmatpush.bf16.msra.mxu0 %v564
      %630 = vmatpush.bf16.msra.mxu0 %v562
      %631 = vmatpush.bf16.msra.mxu0 %v560
      %632 = vmatmul.bf16.gmra.mxu0 %v424
      %v633 = vpop.f32.mrf.mxu0
      %v634 = vadd.f32 %v460, %v633
      %v635 = vpop.f32.mrf.mxu0
      %v636 = vadd.f32 %v460, %v635
      %637 = vdwg.mxu0
      %638 = vmatpush.bf16.msra.mxu0 %v590
      %639 = vmatpush.bf16.msra.mxu0 %v588
      %640 = vmatpush.bf16.msra.mxu0 %v586
      %641 = vmatpush.bf16.msra.mxu0 %v584
      %642 = vmatpush.bf16.msra.mxu0 %v582
      %643 = vmatpush.bf16.msra.mxu0 %v580
      %644 = vmatpush.bf16.msra.mxu0 %v578
      %645 = vmatpush.bf16.msra.mxu0 %v576
      %646 = vmatmul.bf16.gmra.mxu0 %v425
      %v647 = vpop.f32.mrf.mxu0
      %v648 = vadd.f32 %v634, %v647
      %v649 = vpop.f32.mrf.mxu0
      %v650 = vadd.f32 %v636, %v649
      %651 = vdwg.mxu0
      %652 = vmatpush.bf16.msra.mxu0 %v575
      %653 = vmatpush.bf16.msra.mxu0 %v573
      %654 = vmatpush.bf16.msra.mxu0 %v571
      %655 = vmatpush.bf16.msra.mxu0 %v569
      %656 = vmatpush.bf16.msra.mxu0 %v567
      %657 = vmatpush.bf16.msra.mxu0 %v565
      %658 = vmatpush.bf16.msra.mxu0 %v563
      %659 = vmatpush.bf16.msra.mxu0 %v561
      %660 = vmatmul.bf16.gmra.mxu0 %v424
      %v661 = vpop.f32.mrf.mxu0
      %v662 = vadd.f32 %v461, %v661
      %v663 = vpop.f32.mrf.mxu0
      %v664 = vadd.f32 %v461, %v663
      %665 = vdwg.mxu0
      %666 = vmatpush.bf16.msra.mxu0 %v591
      %667 = vmatpush.bf16.msra.mxu0 %v589
      %668 = vmatpush.bf16.msra.mxu0 %v587
      %669 = vmatpush.bf16.msra.mxu0 %v585
      %670 = vmatpush.bf16.msra.mxu0 %v583
      %671 = vmatpush.bf16.msra.mxu0 %v581
      %672 = vmatpush.bf16.msra.mxu0 %v579
      %673 = vmatpush.bf16.msra.mxu0 %v577
      %674 = vmatmul.bf16.gmra.mxu0 %v425
      %v675 = vpop.f32.mrf.mxu0
      %v676 = vadd.f32 %v662, %v675
      %v677 = vpop.f32.mrf.mxu0
      %v678 = vadd.f32 %v664, %v677
      %679 = vdwg.mxu0
      %v680 = vld [vmem:[%s3] sm:$0xf]
      %v681 = vld [vmem:[%s3 + $0x4] sm:$0xf]
      %v682 = vld [vmem:[%s3 + $0x8] sm:$0xf]
      %v683 = vld [vmem:[%s3 + $0xc] sm:$0xf]
      %v684 = vld [vmem:[%s3 + $0x10] sm:$0xf]
      %v685 = vld [vmem:[%s3 + $0x14] sm:$0xf]
      %v686 = vld [vmem:[%s3 + $0x18] sm:$0xf]
      %v687 = vld [vmem:[%s3 + $0x1c] sm:$0xf]
      %v688 = vld [vmem:[%s3 + $0x20] sm:$0xf]
      %v689 = vld [vmem:[%s3 + $0x24] sm:$0xf]
      %v690 = vld [vmem:[%s3 + $0x28] sm:$0xf]
      %v691 = vld [vmem:[%s3 + $0x2c] sm:$0xf]
      %v692 = vld [vmem:[%s3 + $0x30] sm:$0xf]
      %v693 = vld [vmem:[%s3 + $0x34] sm:$0xf]
      %v694 = vld [vmem:[%s3 + $0x38] sm:$0xf]
      %v695 = vld [vmem:[%s3 + $0x3c] sm:$0xf]
      %v696 = vld [vmem:[%s3 + $0x40] sm:$0xf]
      %v697 = vld [vmem:[%s3 + $0x44] sm:$0xf]
      %v698 = vld [vmem:[%s3 + $0x48] sm:$0xf]
      %v699 = vld [vmem:[%s3 + $0x4c] sm:$0xf]
      %v700 = vld [vmem:[%s3 + $0x50] sm:$0xf]
      %v701 = vld [vmem:[%s3 + $0x54] sm:$0xf]
      %v702 = vld [vmem:[%s3 + $0x58] sm:$0xf]
      %v703 = vld [vmem:[%s3 + $0x5c] sm:$0xf]
      %v704 = vld [vmem:[%s3 + $0x60] sm:$0xf]
      %v705 = vld [vmem:[%s3 + $0x64] sm:$0xf]
      %v706 = vld [vmem:[%s3 + $0x68] sm:$0xf]
      %v707 = vld [vmem:[%s3 + $0x6c] sm:$0xf]
      %v708 = vld [vmem:[%s3 + $0x70] sm:$0xf]
      %v709 = vld [vmem:[%s3 + $0x74] sm:$0xf]
      %v710 = vld [vmem:[%s3 + $0x78] sm:$0xf]
      %v711 = vld [vmem:[%s3 + $0x7c] sm:$0xf]
      %v712 = vld [vmem:[%s8] sm:$0x1]
      %v714 = vperm.slane %v712, 0
      %v718 = vunpack.c.l.b16 %v408
      %v719 = vunpack.c.h.b16 %v408
      %v720 = vunpack.c.l.b16 %v409
      %v721 = vunpack.c.h.b16 %v409
      %v722 = vpack.c.b16 %v720, %v718
      %v723 = vpack.c.b16 %v721, %v719
      %v758 = vunpack.c.l.b16 %v680
      %v759 = vunpack.c.l.b16 %v681
      %v760 = vunpack.c.l.b16 %v682
      %v761 = vunpack.c.l.b16 %v683
      %v762 = vunpack.c.l.b16 %v684
      %v763 = vunpack.c.l.b16 %v685
      %v764 = vunpack.c.l.b16 %v686
      %v765 = vunpack.c.l.b16 %v687
      %v766 = vunpack.c.l.b16 %v688
      %v767 = vunpack.c.l.b16 %v689
      %v768 = vunpack.c.l.b16 %v690
      %v769 = vunpack.c.l.b16 %v691
      %v770 = vunpack.c.l.b16 %v692
      %v771 = vunpack.c.l.b16 %v693
      %v772 = vunpack.c.l.b16 %v694
      %v773 = vunpack.c.l.b16 %v695
      %v774 = vunpack.c.l.b16 %v696
      %v775 = vunpack.c.l.b16 %v697
      %v776 = vunpack.c.l.b16 %v698
      %v777 = vunpack.c.l.b16 %v699
      %v778 = vunpack.c.l.b16 %v700
      %v779 = vunpack.c.l.b16 %v701
      %v780 = vunpack.c.l.b16 %v702
      %v781 = vunpack.c.l.b16 %v703
      %v782 = vunpack.c.l.b16 %v704
      %v783 = vunpack.c.l.b16 %v705
      %v784 = vunpack.c.l.b16 %v706
      %v785 = vunpack.c.l.b16 %v707
      %v786 = vunpack.c.l.b16 %v708
      %v787 = vunpack.c.l.b16 %v709
      %v788 = vunpack.c.l.b16 %v710
      %v789 = vunpack.c.l.b16 %v711
      %v790 = vpack.c.b16 %v759, %v758
      %v791 = vpack.c.b16 %v761, %v760
      %v792 = vpack.c.b16 %v763, %v762
      %v793 = vpack.c.b16 %v765, %v764
      %v794 = vpack.c.b16 %v767, %v766
      %v795 = vpack.c.b16 %v769, %v768
      %v796 = vpack.c.b16 %v771, %v770
      %v797 = vpack.c.b16 %v773, %v772
      %v798 = vpack.c.b16 %v775, %v774
      %v799 = vpack.c.b16 %v777, %v776
      %v800 = vpack.c.b16 %v779, %v778
      %v801 = vpack.c.b16 %v781, %v780
      %v802 = vpack.c.b16 %v783, %v782
      %v803 = vpack.c.b16 %v785, %v784
      %v804 = vpack.c.b16 %v787, %v786
      %v805 = vpack.c.b16 %v789, %v788
      %822 = vmatpush.bf16.msra.mxu0 %v797
      %823 = vmatpush.bf16.msra.mxu0 %v796
      %824 = vmatpush.bf16.msra.mxu0 %v795
      %825 = vmatpush.bf16.msra.mxu0 %v794
      %826 = vmatpush.bf16.msra.mxu0 %v793
      %827 = vmatpush.bf16.msra.mxu0 %v792
      %828 = vmatpush.bf16.msra.mxu0 %v791
      %829 = vmatpush.bf16.msra.mxu0 %v790
      %830 = vmatmul.bf16.gmra.mxu0 %v722
      %v831 = vpop.f32.mrf.mxu0
      %v832 = vadd.f32 %v714, %v831
      %v833 = vpop.f32.mrf.mxu0
      %v834 = vadd.f32 %v714, %v833
      %835 = vdwg.mxu0
      %836 = vmatpush.bf16.msra.mxu0 %v805
      %837 = vmatpush.bf16.msra.mxu0 %v804
      %838 = vmatpush.bf16.msra.mxu0 %v803
      %839 = vmatpush.bf16.msra.mxu0 %v802
      %840 = vmatpush.bf16.msra.mxu0 %v801
      %841 = vmatpush.bf16.msra.mxu0 %v800
      %842 = vmatpush.bf16.msra.mxu0 %v799
      %843 = vmatpush.bf16.msra.mxu0 %v798
      %844 = vmatmul.bf16.gmra.mxu0 %v723
      %v845 = vpop.f32.mrf.mxu0
      %v846 = vadd.f32 %v832, %v845
      %v847 = vpop.f32.mrf.mxu0
      %v848 = vadd.f32 %v834, %v847
      %849 = vdwg.mxu0
      %v850 = vmax.f32 %v846, 0.0
      %v851 = vmax.f32 %v848, 0.0
      %v852 = vpack.c.bf16 %v851, %v850
      %v853 = vld [vmem:[%s4] sm:$0xff]
      %v854 = vld [vmem:[%s4 + $0x8] sm:$0xff]
      %v855 = vld [vmem:[%s4 + $0x10] sm:$0xff]
      %v856 = vld [vmem:[%s4 + $0x18] sm:$0xff]
      %v857 = vld [vmem:[%s4 + $0x20] sm:$0xff]
      %v858 = vld [vmem:[%s4 + $0x28] sm:$0xff]
      %v859 = vld [vmem:[%s4 + $0x30] sm:$0xff]
      %v860 = vld [vmem:[%s4 + $0x38] sm:$0xff]
      %v861 = vld [vmem:[%s9] sm:$0x3]
      %v863 = vperm.slane %v861, 0
      %v864 = vperm.slane %v861, 1
      %v875 = vunpack.c.l.b16 %v853
      %v876 = vunpack.c.h.b16 %v853
      %v877 = vunpack.c.l.b16 %v854
      %v878 = vunpack.c.h.b16 %v854
      %v879 = vunpack.c.l.b16 %v855
      %v880 = vunpack.c.h.b16 %v855
      %v881 = vunpack.c.l.b16 %v856
      %v882 = vunpack.c.h.b16 %v856
      %v883 = vunpack.c.l.b16 %v857
      %v884 = vunpack.c.h.b16 %v857
      %v885 = vunpack.c.l.b16 %v858
      %v886 = vunpack.c.h.b16 %v858
      %v887 = vunpack.c.l.b16 %v859
      %v888 = vunpack.c.h.b16 %v859
      %v889 = vunpack.c.l.b16 %v860
      %v890 = vunpack.c.h.b16 %v860
      %v891 = vpack.c.b16 %v877, %v875
      %v892 = vpack.c.b16 %v878, %v876
      %v893 = vpack.c.b16 %v881, %v879
      %v894 = vpack.c.b16 %v882, %v880
      %v895 = vpack.c.b16 %v885, %v883
      %v896 = vpack.c.b16 %v886, %v884
      %v897 = vpack.c.b16 %v889, %v887
      %v898 = vpack.c.b16 %v890, %v888
      %vm907 = vcmask 523264
      %v909 = vsel %vm907, %v852, 0
      %911 = vmatpush.bf16.msra.mxu0 0
      %912 = vmatpush.bf16.msra.mxu0 0
      %913 = vmatpush.bf16.msra.mxu0 0
      %914 = vmatpush.bf16.msra.mxu0 0
      %915 = vmatpush.bf16.msra.mxu0 %v897
      %916 = vmatpush.bf16.msra.mxu0 %v895
      %917 = vmatpush.bf16.msra.mxu0 %v893
      %918 = vmatpush.bf16.msra.mxu0 %v891
      %919 = vmatmul.bf16.gmra.mxu0 %v909
      %v920 = vpop.f32.mrf.mxu0
      %v921 = vadd.f32 %v863, %v920
      %v922 = vpop.f32.mrf.mxu0
      %v923 = vadd.f32 %v863, %v922
      %924 = vdwg.mxu0
      %925 = vmatpush.bf16.msra.mxu0 0
      %926 = vmatpush.bf16.msra.mxu0 0
      %927 = vmatpush.bf16.msra.mxu0 0
      %928 = vmatpush.bf16.msra.mxu0 0
      %929 = vmatpush.bf16.msra.mxu0 %v898
      %930 = vmatpush.bf16.msra.mxu0 %v896
      %931 = vmatpush.bf16.msra.mxu0 %v894
      %932 = vmatpush.bf16.msra.mxu0 %v892
      %933 = vmatmul.bf16.gmra.mxu0 %v909
      %v934 = vpop.f32.mrf.mxu0
      %v935 = vadd.f32 %v864, %v934
      %v936 = vpop.f32.mrf.mxu0
      %v937 = vadd.f32 %v864, %v936
      %938 = vdwg.mxu0
      %v939 = vmax.f32 %v921, 0.0
      %v940 = vmax.f32 %v935, 0.0
      %v941 = vmax.f32 %v923, 0.0
      %v942 = vmax.f32 %v937, 0.0
      %v943 = vpack.c.bf16 %v941, %v939
      %v944 = vpack.c.bf16 %v942, %v940
      %v945 = vld [vmem:[%s5] sm:$0xff]
      %v946 = vld [vmem:[%s5 + $0x8] sm:$0xff]
      %v947 = vld [vmem:[%s5 + $0x10] sm:$0xff]
      %v948 = vld [vmem:[%s5 + $0x18] sm:$0xff]
      %v949 = vld [vmem:[%s5 + $0x20] sm:$0xff]
      %v950 = vld [vmem:[%s5 + $0x28] sm:$0xff]
      %v951 = vld [vmem:[%s5 + $0x30] sm:$0xff]
      %v952 = vld [vmem:[%s5 + $0x38] sm:$0xff]
      %v953 = vld [vmem:[%s5 + $0x40] sm:$0xff]
      %v954 = vld [vmem:[%s5 + $0x48] sm:$0xff]
      %v955 = vld [vmem:[%s5 + $0x50] sm:$0xff]
      %v956 = vld [vmem:[%s5 + $0x58] sm:$0xff]
      %v957 = vld [vmem:[%s5 + $0x60] sm:$0xff]
      %v958 = vld [vmem:[%s5 + $0x68] sm:$0xff]
      %v959 = vld [vmem:[%s5 + $0x70] sm:$0xff]
      %v960 = vld [vmem:[%s5 + $0x78] sm:$0xff]
      %v961 = vld [vmem:[%s10] sm:$0x3]
      %v963 = vperm.slane %v961, 0
      %v964 = vperm.slane %v961, 1
      %v983 = vunpack.c.l.b16 %v945
      %v984 = vunpack.c.h.b16 %v945
      %v985 = vunpack.c.l.b16 %v946
      %v986 = vunpack.c.h.b16 %v946
      %v987 = vunpack.c.l.b16 %v947
      %v988 = vunpack.c.h.b16 %v947
      %v989 = vunpack.c.l.b16 %v948
      %v990 = vunpack.c.h.b16 %v948
      %v991 = vunpack.c.l.b16 %v949
      %v992 = vunpack.c.h.b16 %v949
      %v993 = vunpack.c.l.b16 %v950
      %v994 = vunpack.c.h.b16 %v950
      %v995 = vunpack.c.l.b16 %v951
      %v996 = vunpack.c.h.b16 %v951
      %v997 = vunpack.c.l.b16 %v952
      %v998 = vunpack.c.h.b16 %v952
      %v999 = vunpack.c.l.b16 %v953
      %v1000 = vunpack.c.h.b16 %v953
      %v1001 = vunpack.c.l.b16 %v954
      %v1002 = vunpack.c.h.b16 %v954
      %v1003 = vunpack.c.l.b16 %v955
      %v1004 = vunpack.c.h.b16 %v955
      %v1005 = vunpack.c.l.b16 %v956
      %v1006 = vunpack.c.h.b16 %v956
      %v1007 = vunpack.c.l.b16 %v957
      %v1008 = vunpack.c.h.b16 %v957
      %v1009 = vunpack.c.l.b16 %v958
      %v1010 = vunpack.c.h.b16 %v958
      %v1011 = vunpack.c.l.b16 %v959
      %v1012 = vunpack.c.h.b16 %v959
      %v1013 = vunpack.c.l.b16 %v960
      %v1014 = vunpack.c.h.b16 %v960
      %v1015 = vpack.c.b16 %v985, %v983
      %v1016 = vpack.c.b16 %v986, %v984
      %v1017 = vpack.c.b16 %v989, %v987
      %v1018 = vpack.c.b16 %v990, %v988
      %v1019 = vpack.c.b16 %v993, %v991
      %v1020 = vpack.c.b16 %v994, %v992
      %v1021 = vpack.c.b16 %v997, %v995
      %v1022 = vpack.c.b16 %v998, %v996
      %v1023 = vpack.c.b16 %v1001, %v999
      %v1024 = vpack.c.b16 %v1002, %v1000
      %v1025 = vpack.c.b16 %v1005, %v1003
      %v1026 = vpack.c.b16 %v1006, %v1004
      %v1027 = vpack.c.b16 %v1009, %v1007
      %v1028 = vpack.c.b16 %v1010, %v1008
      %v1029 = vpack.c.b16 %v1013, %v1011
      %v1030 = vpack.c.b16 %v1014, %v1012
      %1047 = vmatpush.bf16.msra.mxu0 %v1029
      %1048 = vmatpush.bf16.msra.mxu0 %v1027
      %1049 = vmatpush.bf16.msra.mxu0 %v1025
      %1050 = vmatpush.bf16.msra.mxu0 %v1023
      %1051 = vmatpush.bf16.msra.mxu0 %v1021
      %1052 = vmatpush.bf16.msra.mxu0 %v1019
      %1053 = vmatpush.bf16.msra.mxu0 %v1017
      %1054 = vmatpush.bf16.msra.mxu0 %v1015
      %1055 = vmatmul.bf16.gmra.mxu0 %v943
      %v1056 = vpop.f32.mrf.mxu0
      %v1057 = vadd.f32 %v963, %v1056
      %v1058 = vpop.f32.mrf.mxu0
      %v1059 = vadd.f32 %v963, %v1058
      %1060 = vmatmul.bf16.gmra.mxu0 %v944
      %v1061 = vpop.f32.mrf.mxu0
      %v1062 = vadd.f32 %v963, %v1061
      %v1063 = vpop.f32.mrf.mxu0
      %v1064 = vadd.f32 %v963, %v1063
      %1065 = vdwg.mxu0
      %1066 = vmatpush.bf16.msra.mxu0 %v1030
      %1067 = vmatpush.bf16.msra.mxu0 %v1028
      %1068 = vmatpush.bf16.msra.mxu0 %v1026
      %1069 = vmatpush.bf16.msra.mxu0 %v1024
      %1070 = vmatpush.bf16.msra.mxu0 %v1022
      %1071 = vmatpush.bf16.msra.mxu0 %v1020
      %1072 = vmatpush.bf16.msra.mxu0 %v1018
      %1073 = vmatpush.bf16.msra.mxu0 %v1016
      %1074 = vmatmul.bf16.gmra.mxu0 %v943
      %v1075 = vpop.f32.mrf.mxu0
      %v1076 = vadd.f32 %v964, %v1075
      %v1077 = vpop.f32.mrf.mxu0
      %v1078 = vadd.f32 %v964, %v1077
      %1079 = vmatmul.bf16.gmra.mxu0 %v944
      %v1080 = vpop.f32.mrf.mxu0
      %v1081 = vadd.f32 %v964, %v1080
      %v1082 = vpop.f32.mrf.mxu0
      %v1083 = vadd.f32 %v964, %v1082
      %1084 = vdwg.mxu0
      %v1085 = vmax.f32 %v1057, 0.0
      %v1086 = vmax.f32 %v1076, 0.0
      %v1087 = vmax.f32 %v1059, 0.0
      %v1088 = vmax.f32 %v1078, 0.0
      %v1089 = vmax.f32 %v1062, 0.0
      %v1090 = vmax.f32 %v1081, 0.0
      %v1091 = vmax.f32 %v1064, 0.0
      %v1092 = vmax.f32 %v1083, 0.0
      %v1093 = vld [vmem:[%s6] sm:$0xff]
      %v1094 = vld [vmem:[%s6 + $0x8] sm:$0xff]
      %v1095 = vld [vmem:[%s6 + $0x10] sm:$0xff]
      %v1096 = vld [vmem:[%s6 + $0x18] sm:$0xff]
      %vm1097 = vcmask 392192
      %v1099 = vsel %vm1097, %v1093, 0
      %v1102 = vsel %vm1097, %v1094, 0
      %v1105 = vsel %vm1097, %v1095, 0
      %v1108 = vsel %vm1097, %v1096, 0
      %1110 = vmatpush.msra.mxu0 0.0
      %1111 = vmatpush.msra.mxu0 0.0
      %1112 = vmatpush.msra.mxu0 0.0
      %1113 = vmatpush.msra.mxu0 0.0
      %1114 = vmatpush.msra.mxu0 0.0
      %1115 = vmatpush.msra.mxu0 0.0
      %1116 = vmatpush.msra.mxu0 0.0
      %1117 = vmatpush.msra.mxu0 0.0
      %1118 = vmatpush.msra.mxu0 0.0
      %1119 = vmatpush.msra.mxu0 0.0
      %1120 = vmatpush.msra.mxu0 %v1091
      %1121 = vmatpush.msra.mxu0 %v1089
      %1122 = vmatpush.msra.mxu0 %v1087
      %1123 = vmatpush.msra.mxu0 %v1085
      %1124 = vmatpush.msra.mxu0 %v650
      %1125 = vmatpush.msra.mxu0 %v648
      %1126 = vmatmul.f32.gmra.mxu0 %v1099
      %v1127 = vpop.f32.mrf.mxu0
      %v1128 = vadd.f32 0.0, %v1127
      %1129 = vmatmul.f32.gmra.mxu0 %v1102
      %v1130 = vpop.f32.mrf.mxu0
      %v1131 = vadd.f32 0.0, %v1130
      %1132 = vmatmul.f32.gmra.mxu0 %v1105
      %v1133 = vpop.f32.mrf.mxu0
      %v1134 = vadd.f32 0.0, %v1133
      %1135 = vmatmul.f32.gmra.mxu0 %v1108
      %v1136 = vpop.f32.mrf.mxu0
      %v1137 = vadd.f32 0.0, %v1136
      %1138 = vdwg.mxu0
      %1139 = vmatpush.msra.mxu0 0.0
      %1140 = vmatpush.msra.mxu0 0.0
      %1141 = vmatpush.msra.mxu0 0.0
      %1142 = vmatpush.msra.mxu0 0.0
      %1143 = vmatpush.msra.mxu0 0.0
      %1144 = vmatpush.msra.mxu0 0.0
      %1145 = vmatpush.msra.mxu0 0.0
      %1146 = vmatpush.msra.mxu0 0.0
      %1147 = vmatpush.msra.mxu0 0.0
      %1148 = vmatpush.msra.mxu0 0.0
      %1149 = vmatpush.msra.mxu0 %v1092
      %1150 = vmatpush.msra.mxu0 %v1090
      %1151 = vmatpush.msra.mxu0 %v1088
      %1152 = vmatpush.msra.mxu0 %v1086
      %1153 = vmatpush.msra.mxu0 %v678
      %1154 = vmatpush.msra.mxu0 %v676
      %1155 = vmatmul.f32.gmra.mxu0 %v1099
      %v1156 = vpop.f32.mrf.mxu0
      %v1157 = vadd.f32 0.0, %v1156
      %1158 = vmatmul.f32.gmra.mxu0 %v1102
      %v1159 = vpop.f32.mrf.mxu0
      %v1160 = vadd.f32 0.0, %v1159
      %1161 = vmatmul.f32.gmra.mxu0 %v1105
      %v1162 = vpop.f32.mrf.mxu0
      %v1163 = vadd.f32 0.0, %v1162
      %1164 = vmatmul.f32.gmra.mxu0 %v1108
      %v1165 = vpop.f32.mrf.mxu0
      %v1166 = vadd.f32 0.0, %v1165
      %1167 = vdwg.mxu0
      %v1168 = vmax.f32 %v1128, 0.0
      %v1169 = vmax.f32 %v1157, 0.0
      %v1170 = vmax.f32 %v1131, 0.0
      %v1171 = vmax.f32 %v1160, 0.0
      %v1172 = vmax.f32 %v1134, 0.0
      %v1173 = vmax.f32 %v1163, 0.0
      %v1174 = vmax.f32 %v1137, 0.0
      %v1175 = vmax.f32 %v1166, 0.0
      %v1176 = vpack.c.bf16 %v1169, %v1168
      %v1177 = vpack.c.bf16 %v1171, %v1170
      %v1178 = vpack.c.bf16 %v1173, %v1172
      %v1179 = vpack.c.bf16 %v1175, %v1174
      %1180 = vst [vmem:[%s406] sm:$0xff] %v1176
      %1181 = vst [vmem:[%s406 + $0x8] sm:$0xff] %v1177
      %1182 = vst [vmem:[%s406 + $0x10] sm:$0xff] %v1178
      %1183 = vst [vmem:[%s406 + $0x18] sm:$0xff] %v1179
      %p1184 = scmp.lt.s32.totalorder %s22, 1
      %s1185 = scalar_select %p1184, %s22, 1
      %s1186 = smul.addr %s1185, 8
      %s1187 = smul.addr %s1186, 4
      %s1188 = scalar_lea.vmem %s11, %s1187
      // Predicated region
      $region65: #{upsampling_bottleneck.1} parent=63 // pred_check
        %p1189 = pneg %p281
      $region66: #{upsampling_bottleneck.1} parent=63 // pred_check_branch
        %1191 = sbr.rel (%p1189) target = $region68
      $region67: #{upsampling_bottleneck.1} parent=63 // pred_region
        _
      $region68: #{upsampling_bottleneck.1} parent=63 // pred_fallthru
        _
    $region64: #{upsampling_bottleneck.1} parent=5 // pred_fallthru
      _
    %p1192 = scmp.le.s32.totalorder 2, %s17
    // Predicated region
    $region69: #{upsampling_bottleneck.1} parent=5 // pred_check
      %p1193 = pneg %p1192
    $region70: #{upsampling_bottleneck.1} parent=5 // pred_check_branch
      %1195 = sbr.rel (%p1193) target = $region72
    $region71: #{upsampling_bottleneck.1} parent=5 // pred_region
      %s1196 = ssub.s32 %s17, 2
      // Predicated region
      $region73: #{upsampling_bottleneck.1} parent=71 // pred_check
        %p1197 = pneg %p287
      $region74: #{upsampling_bottleneck.1} parent=71 // pred_check_branch
        %1199 = sbr.rel (%p1197) target = $region76
      $region75: #{upsampling_bottleneck.1} parent=71 // pred_region
        %p1200 = scmp.lt.s32.totalorder %s23, 1
        %s1201 = scalar_select %p1200, %s23, 1
        %s1202 = smul.addr %s1201, 8
        %s1203 = smul.addr %s1202, 4
        %s1204 = scalar_lea.vmem %s11, %s1203
      $region76: #{upsampling_bottleneck.1} parent=71 // pred_fallthru
        _
    $region72: #{upsampling_bottleneck.1} parent=5 // pred_fallthru
      _
  $region6: #{upsampling_bottleneck.1} parent=0 // loop_footer
    %s21 = sadd.s32 1, %s17
  $region7: #{upsampling_bottleneck.1} parent=0 // loop_footer_branch
    %16 = sbr.rel target = $region3
  $region8: #{upsampling_bottleneck.1} parent=0 // loop_exit
    _

</llo_original>
